<compile_context>
chip_gen: v7x
topology: tpu7x:2x2x1
jax: 0.10.0
libtpu: 0.0.40
codegen_flags: <defaults>
</compile_context>

<pallas_src>
import jax
import jax.numpy as jnp
import numpy as np
from jax.experimental import pallas as pl
from jax.experimental.pallas import tpu as pltpu


def _round_up(a, b):
    return ((a + b - 1) // b) * b


def _max_over_dim0_kernel(x_ref, o_ref):
    # x_ref: (n, TR, LANES) block; o_ref: (TR, LANES) block.
    # Elementwise maximum over the leading (reduction) axis, expressed as
    # n-1 jnp.maximum ops over dense 2-D slabs instead of a cross-sublane
    # jnp.max(axis=0) over a thin (n, tile) slab.
    n = x_ref.shape[0]
    acc = x_ref[0]
    for i in range(1, n):
        acc = jnp.maximum(acc, x_ref[i])
    o_ref[...] = acc


def maxout(x):
    """Equivalent of torch.max(x, dim=0).values for an arbitrary-rank input."""
    n = x.shape[0]
    rest = x.shape[1:]
    flat = int(np.prod(rest)) if rest else 1
    itemsize = x.dtype.itemsize

    x2 = x.reshape(n, flat)

    # ---- dense 2-D layout of the flattened trailing dims ----
    # Lane (last) dim: multiple of 128; 512 gives long unmasked stores / wide DMAs.
    lanes = 512 if flat >= 512 else 128
    # Sublane multiple (dense packing for sub-32-bit dtypes: 8 f32 / 16 bf16 / 32 i8).
    sub = max(8, 32 // itemsize)

    rows = _round_up(flat, lanes) // lanes

    # Row-tile: large enough to amortize the ~0.35us per-grid-step overhead,
    # small enough that the double-buffered (input + output) footprint stays a
    # few MiB (safe on v5e/v6e defaults and on v7x's 64 MiB VMEM).
    # Target roughly 2 MiB per input block: n * tr * lanes * itemsize.
    row_budget = (2 * 1024 * 1024) // max(1, n * lanes * itemsize)
    row_budget = max(sub, (row_budget // sub) * sub)
    tr = min(512, row_budget, _round_up(rows, sub))

    rows_p = _round_up(rows, tr)
    flat_p = rows_p * lanes
    if flat_p != flat:
        # Pad value is irrelevant: the padded region is sliced off below.
        x2 = jnp.pad(x2, ((0, 0), (0, flat_p - flat)))
    x3 = x2.reshape(n, rows_p, lanes)

    grid = (rows_p // tr,)

    out = pl.pallas_call(
        _max_over_dim0_kernel,
        out_shape=jax.ShapeDtypeStruct((rows_p, lanes), x.dtype),
        grid_spec=pltpu.PrefetchScalarGridSpec(
            num_scalar_prefetch=0,
            grid=grid,
            in_specs=[pl.BlockSpec((n, tr, lanes), lambda i: (0, i, 0))],
            out_specs=pl.BlockSpec((tr, lanes), lambda i: (i, 0)),
        ),
        compiler_params=pltpu.CompilerParams(
            dimension_semantics=("parallel",)
        ),
    )(x3)

    return out.reshape(-1)[:flat].reshape(rest)


if __name__ == "__main__":
    key = jax.random.PRNGKey(0)
    # Small NCHW input; dim 0 is the axis being max-reduced (Maxout semantics).
    x = jax.random.normal(key, (2, 4, 16, 16), dtype=jnp.float32)

    y = maxout(x)
    y = jax.block_until_ready(y)

    # Reference check against plain JAX (same semantics as torch.max(dim=0).values).
    y_ref = jnp.max(x, axis=0)
    np.testing.assert_allclose(np.asarray(y), np.asarray(y_ref), rtol=0, atol=0)
    assert y.shape == (4, 16, 16)
    assert y.dtype == x.dtype

    print("KERNEL_OK")
</pallas_src>

<mosaic_0001>
module attributes {stable_mosaic.version = 11 : i64} {
  func.func @_max_over_dim0_kernel(%arg0: i32, %arg1: memref<2x8x512xf32, #tpu.memory_space<vmem>>, %arg2: memref<8x512xf32, #tpu.memory_space<vmem>>) attributes {dimension_semantics = [#tpu.dimension_semantics<parallel>], iteration_bounds = array<i64: 1>, scalar_prefetch = 0 : i64, scratch_operands = 0 : i64, tpu.core_type = #tpu.core_type<tc>, window_params = [{transform_indices = @transform_0, window_bounds = array<i64: 2, 8, 512>}, {transform_indices = @transform_1, window_bounds = array<i64: 8, 512>}]} {
    %c0 = arith.constant 0 : index
    %c0_0 = arith.constant 0 : index
    %c0_1 = arith.constant 0 : index
    %0 = vector.load %arg1[%c0, %c0_0, %c0_1] : memref<2x8x512xf32, #tpu.memory_space<vmem>>, vector<1x8x512xf32>
    %1 = vector.shape_cast %0 : vector<1x8x512xf32> to vector<8x512xf32>
    %c1 = arith.constant 1 : index
    %c0_2 = arith.constant 0 : index
    %c0_3 = arith.constant 0 : index
    %2 = vector.load %arg1[%c1, %c0_2, %c0_3] : memref<2x8x512xf32, #tpu.memory_space<vmem>>, vector<1x8x512xf32>
    %3 = vector.shape_cast %2 : vector<1x8x512xf32> to vector<8x512xf32>
    %4 = arith.maximumf %1, %3 : vector<8x512xf32>
    %c0_4 = arith.constant 0 : index
    %c0_5 = arith.constant 0 : index
    %5 = vector.load %arg2[%c0_4, %c0_5] : memref<8x512xf32, #tpu.memory_space<vmem>>, vector<8x512xf32>
    tpu.vector_store %arg2[%c0_4, %c0_5], %4 {strides = array<i32>} : memref<8x512xf32, #tpu.memory_space<vmem>>, vector<8x512xf32>,
    return
  }
  func.func @transform_0(%arg0: i32) -> (i32, i32, i32) {
    %c0_i32 = arith.constant 0 : i32
    %c0_i32_0 = arith.constant 0 : i32
    %c0_i32_1 = arith.constant 0 : i32
    return %c0_i32, %arg0, %c0_i32_0 : i32, i32, i32
  }
  func.func @transform_1(%arg0: i32) -> (i32, i32) {
    %c0_i32 = arith.constant 0 : i32
    %c0_i32_0 = arith.constant 0 : i32
    return %arg0, %c0_i32 : i32, i32
  }
}

</mosaic_0001>

<llo_original>
// kernel: tpu_custom_call.1
$region0: #{tpu_custom_call.1}
  #allocation0 [shape = 'u32[]', space=smem, size = 0x4, offset = 0x4, fixed_abs, tag = 'smem constant byte address 0x4 - core index']
  #allocation1 [shape = 'u32[144,128]{1,0:T(1,128)}', space=vmem, size = 0x12000, scoped, tag = 'internal scratch']
  %s0 = inlined_call_operand.hbm [shape: f32[2,8,512], index: 0, kind: input, shape index: {}]
  %s1 = inlined_call_operand.hbm [shape: f32[8,512], index: 1, kind: output, shape index: {}]
  %s2 = sld [smem:[#allocation0]]
  $region18: #{tpu_custom_call.1} parent=0
    _
  %s4 = ssub.s32 1, %s2
  %s5 = scalar_select 0, %s4, %s2
  $region1: #{tpu_custom_call.1} parent=0
    #allocation2 [shape = 'u8[32768]{0}', space=vmem, size = 0x8000, scoped, tag = 'input window, operand 0, single buffered']
    #allocation3 [shape = 's32[1]{0}', space=sflag, size = 0x4, scoped, tag = 'scoped memory for tpu_custom_call.1']
    #allocation4 [shape = 's32[1]{0}', space=sflag, size = 0x4, scoped, tag = 'scoped memory for tpu_custom_call.1']
    #allocation5 [shape = 'u8[16384]{0}', space=vmem, size = 0x4000, scoped, tag = 'output window, operand 0, single buffered']
    %6 = vsyncpa [#allocation3], 0
    %7 = vsyncpa [#allocation4], 0
    // Predicated region
    $region2: #{tpu_custom_call.1} parent=1 // pred_check
      _
    $region3: #{tpu_custom_call.1} parent=1 // pred_check_branch
      %9 = sbr.rel (0) target = $region5
    $region4: #{tpu_custom_call.1} parent=1 // pred_region
      %s11 = ssub.s32 1024, 1024
      %12 = vsyncadd [#allocation3], %s11
      %s13 = sshll.u32 [#allocation2], 4
      %s14 = int_to_ptr.vmem [resolvable:$true] %s13
      %19 = dma.hbm_to_vmem [thread:$0]  %s0, 1024, %s14, [#allocation3], 512, 512, 32
    $region5: #{tpu_custom_call.1} parent=1 // pred_fallthru
      _
    // Predicated region
    $region6: #{tpu_custom_call.1} parent=1 // pred_check
      _
    $region7: #{tpu_custom_call.1} parent=1 // pred_check_branch
      %21 = sbr.rel (0) target = $region9
    $region8: #{tpu_custom_call.1} parent=1 // pred_region
      %22 = dma.done [#allocation3], 1024
    $region9: #{tpu_custom_call.1} parent=1 // pred_fallthru
      _
    %v23 = vld [vmem:[#allocation2] sm:$0xff]
    %v24 = vld [vmem:[#allocation2 + $0x8] sm:$0xff]
    %v25 = vld [vmem:[#allocation2 + $0x10] sm:$0xff]
    %v26 = vld [vmem:[#allocation2 + $0x18] sm:$0xff]
    %s27 = scalar_lea.vmem [#allocation2], 32
    %v28 = vld [vmem:[%s27] sm:$0xff]
    %v29 = vld [vmem:[%s27 + $0x8] sm:$0xff]
    %v30 = vld [vmem:[%s27 + $0x10] sm:$0xff]
    %v31 = vld [vmem:[%s27 + $0x18] sm:$0xff]
    %v32 = vmax.f32 %v23, %v28
    %v33 = vmax.f32 %v24, %v29
    %v34 = vmax.f32 %v25, %v30
    %v35 = vmax.f32 %v26, %v31
    %36 = vst [vmem:[#allocation5] sm:$0xff] %v32
    %37 = vst [vmem:[#allocation5 + $0x8] sm:$0xff] %v33
    %38 = vst [vmem:[#allocation5 + $0x10] sm:$0xff] %v34
    %39 = vst [vmem:[#allocation5 + $0x18] sm:$0xff] %v35
    // Predicated region
    $region10: #{tpu_custom_call.1} parent=1 // pred_check
      _
    $region11: #{tpu_custom_call.1} parent=1 // pred_check_branch
      %41 = sbr.rel (0) target = $region13
    $region12: #{tpu_custom_call.1} parent=1 // pred_region
      %s43 = ssub.s32 512, 512
      %44 = vsyncadd [#allocation4], %s43
      %s46 = sshll.u32 [#allocation5], 4
      %s47 = int_to_ptr.vmem [resolvable:$true] %s46
      %49 = dma.vmem_to_hbm [thread:$0]  %s47, 512, %s1, [#allocation4]
    $region13: #{tpu_custom_call.1} parent=1 // pred_fallthru
      _
    // Predicated region
    $region14: #{tpu_custom_call.1} parent=1 // pred_check
      _
    $region15: #{tpu_custom_call.1} parent=1 // pred_check_branch
      %51 = sbr.rel (0) target = $region17
    $region16: #{tpu_custom_call.1} parent=1 // pred_region
      %52 = dma.done [#allocation4], 512
    $region17: #{tpu_custom_call.1} parent=1 // pred_fallthru
      _
    %53 = vsyncpa [#allocation3], 1
    %54 = vsyncpa [#allocation4], 1

</llo_original>
